<compile_context>
chip_gen: v5e
topology: v5e:2x2
jax: 0.10.0
libtpu: 0.0.40
codegen_flags: <defaults>
</compile_context>

<pallas_src>
import functools

import jax
import jax.numpy as jnp
from jax.experimental import pallas as pl
from jax.experimental.pallas import tpu as pltpu


def _round_up(x, m):
    return -(-x // m) * m


def _rnn_kernel(x_ref, h0_ref, wih_ref, whh_ref, wfc_ref, bfc_ref,
                out_ref, hT_ref, hbuf_ref):
    """Single-program kernel; the whole (padded) problem lives in VMEM.

    x_ref  : (T*Bp, Ip)  time-major flattened padded input (ones column appended)
    h0_ref : (Bp, Hp)    initial hidden state (padded, f32)
    wih_ref: (Ip, Hp)    [W_ih^T ; (b_ih+b_hh)] zero-padded
    whh_ref: (Hp, Hp)    W_hh^T, zero-padded
    wfc_ref: (Hp, Op)    W_fc^T, zero-padded
    bfc_ref: (1, Op)     b_fc, zero-padded (f32)
    out_ref: (T*Bp, Op)  per-step logits (time-major flattened, padded)
    hT_ref : (Bp, Hp)    final hidden state (padded)
    hbuf_ref: (T*Bp, Hp) f32 VMEM scratch; holds xproj, then per-step h_t
    """
    Bp = h0_ref.shape[0]
    T = x_ref.shape[0] // Bp

    # Read weights once (no per-step vld of weight operands).
    whh = whh_ref[...]
    wfc = wfc_ref[...]
    bfc = bfc_ref[...]

    # Batched input projection with the RNN biases folded in (ones column):
    # one (T*Bp, Ip) @ (Ip, Hp) MXU op, staged straight into VMEM scratch so
    # it is never held live across the unrolled recurrence.
    hbuf_ref[...] = jnp.dot(x_ref[...], wih_ref[...],
                            preferred_element_type=jnp.float32)

    # Serial recurrence, fully unrolled (T is static and small).  Only the
    # h @ W_hh matmul stays on the serial chain; tanh goes to the EUP slot.
    # Slot t of hbuf is read (xproj_t) and then reused to store h_t.
    h = h0_ref[...].astype(jnp.float32)                        # (Bp, Hp)
    for t in range(T):
        sl = pl.ds(t * Bp, Bp)                                 # static, aligned
        xt = hbuf_ref[sl, :]                                   # (Bp, Hp) f32
        h = jnp.tanh(xt + jnp.dot(h, whh,
                                  preferred_element_type=jnp.float32))
        hbuf_ref[sl, :] = h                                    # slot t is dead

    hT_ref[...] = h.astype(hT_ref.dtype)

    # FC head for all timesteps at once: one (T*Bp, Hp) @ (Hp, Op) matmul fed
    # from the scratch ref, one unmasked lane-dense store.
    h_all = hbuf_ref[...].astype(wfc.dtype)                    # bf16 path: cast once
    out_ref[...] = (jnp.dot(h_all, wfc, preferred_element_type=jnp.float32)
                    + bfc.astype(jnp.float32)).astype(out_ref.dtype)


@functools.partial(jax.jit, static_argnames=("use_bf16",))
def rnn_model_forward(x, hidden, params, use_bf16=False):
    """x: (B, T, I) float32, hidden: (1, B, H) float32 (PyTorch convention)."""
    w_ih, w_hh, b_ih, b_hh, w_fc, b_fc = (
        params["w_ih"], params["w_hh"], params["b_ih"], params["b_hh"],
        params["w_fc"], params["b_fc"])

    B, T, I = x.shape
    H = w_hh.shape[0]
    O = w_fc.shape[0]
    Ia = I + 1                         # +1 ones column for the folded RNN bias

    LANE, SUB = 128, 8
    Bp = _round_up(max(B, SUB), SUB)
    Ip = _round_up(max(Ia, LANE), LANE)
    Hp = _round_up(max(H, LANE), LANE)
    Op = _round_up(max(O, LANE), LANE)

    # Time-major, ones-augmented, zero-padded, flattened: timestep t is a
    # contiguous sublane-aligned block of Bp rows.  (Tiny tensors; the
    # transposes here are negligible at these shapes — see TODO above.)
    x_tm = jnp.transpose(x, (1, 0, 2))                          # (T, B, I)
    x_aug = jnp.concatenate([x_tm, jnp.ones((T, B, 1), x.dtype)], axis=-1)
    x_p = jnp.pad(x_aug, ((0, 0), (0, Bp - B), (0, Ip - Ia)))
    x_p = x_p.reshape(T * Bp, Ip)

    h0_p = jnp.pad(hidden[0], ((0, Bp - B), (0, Hp - H)))       # (Bp, Hp)

    # Pre-transpose + zero-pad weights; RNN biases folded as an extra row of
    # W_ih^T (matches the ones column of x).  Zero padding keeps padded hidden
    # lanes and padded batch rows exactly 0.
    wih_aug = jnp.concatenate([jnp.transpose(w_ih),
                               (b_ih + b_hh)[None, :]], axis=0)  # (Ia, H)
    wih_p = jnp.pad(wih_aug, ((0, Ip - Ia), (0, Hp - H)))
    whh_p = jnp.pad(jnp.transpose(w_hh), ((0, Hp - H), (0, Hp - H)))
    wfc_p = jnp.pad(jnp.transpose(w_fc), ((0, Hp - H), (0, Op - O)))
    bfc_p = jnp.pad(b_fc, (0, Op - O)).reshape(1, Op)

    # Optional bf16 matmul operands (halves DMA bytes, bf16 MXU on v6e/v7x);
    # h / adds / tanh / accumulation stay f32 inside the kernel.
    mm_dtype = jnp.bfloat16 if use_bf16 else jnp.float32
    x_p = x_p.astype(mm_dtype)
    wih_p = wih_p.astype(mm_dtype)
    whh_p = whh_p.astype(mm_dtype)
    wfc_p = wfc_p.astype(mm_dtype)

    vmem = pl.BlockSpec(memory_space=pltpu.MemorySpace.VMEM)

    out_flat, h_final = pl.pallas_call(
        _rnn_kernel,
        out_shape=(
            jax.ShapeDtypeStruct((T * Bp, Op), jnp.float32),
            jax.ShapeDtypeStruct((Bp, Hp), jnp.float32),
        ),
        in_specs=[vmem] * 6,
        out_specs=(vmem, vmem),
        scratch_shapes=[pltpu.VMEM((T * Bp, Hp), jnp.float32)],
    )(x_p, h0_p, wih_p, whh_p, wfc_p, bfc_p)

    out = out_flat.reshape(T, Bp, Op)[:, :B, :O]                # (T, B, O)
    out = jnp.transpose(out, (1, 0, 2))                         # (B, T, O)
    return out, h_final[:B, :H][None, :, :]                     # (1, B, H)


def _pure_jax_ref(x, hidden, params):
    """Reference implementation (plain JAX) for correctness checking."""
    w_ih, w_hh, b_ih, b_hh, w_fc, b_fc = (
        params["w_ih"], params["w_hh"], params["b_ih"], params["b_hh"],
        params["w_fc"], params["b_fc"])
    B, T, I = x.shape
    h = hidden[0]
    outs = []
    for t in range(T):
        h = jnp.tanh(x[:, t, :] @ w_ih.T + b_ih + h @ w_hh.T + b_hh)
        outs.append(h @ w_fc.T + b_fc)
    return jnp.stack(outs, axis=1), h[None]


def init_params(key, input_size, hidden_size, output_size):
    """Deterministic init matching PyTorch's uniform(-1/sqrt(H), 1/sqrt(H))."""
    ks = jax.random.split(key, 6)
    bound = 1.0 / (hidden_size ** 0.5)
    u = lambda k, shape: jax.random.uniform(k, shape, jnp.float32, -bound, bound)
    return {
        "w_ih": u(ks[0], (hidden_size, input_size)),
        "w_hh": u(ks[1], (hidden_size, hidden_size)),
        "b_ih": u(ks[2], (hidden_size,)),
        "b_hh": u(ks[3], (hidden_size,)),
        "w_fc": u(ks[4], (output_size, hidden_size)),
        "b_fc": u(ks[5], (output_size,)),
    }


if __name__ == "__main__":
    input_size = 5     # len('hello') one-hot vocab
    hidden_size = 8
    output_size = 5
    batch = 2
    seq = 6

    key = jax.random.PRNGKey(0)
    k_x, k_p = jax.random.split(key)

    params = init_params(k_p, input_size, hidden_size, output_size)
    x = jax.random.normal(k_x, (batch, seq, input_size), dtype=jnp.float32)
    hidden = jnp.zeros((1, batch, hidden_size), dtype=jnp.float32)

    # f32 path: exact check against pure-JAX reference.
    out, h_new = rnn_model_forward(x, hidden, params)
    out = jax.block_until_ready(out)
    h_new = jax.block_until_ready(h_new)

    out_ref, h_ref = _pure_jax_ref(x, hidden, params)
    assert out.shape == (batch, seq, output_size)
    assert h_new.shape == (1, batch, hidden_size)
    assert jnp.allclose(out, out_ref, atol=1e-5, rtol=1e-5)
    assert jnp.allclose(h_new, h_ref, atol=1e-5, rtol=1e-5)

    # bf16-operand path (v6e/v7x DMA + MXU win): looser tolerance.
    out_bf, h_bf = rnn_model_forward(x, hidden, params, use_bf16=True)
    out_bf = jax.block_until_ready(out_bf)
    h_bf = jax.block_until_ready(h_bf)
    assert jnp.allclose(out_bf, out_ref, atol=1e-1, rtol=1e-1)
    assert jnp.allclose(h_bf, h_ref, atol=1e-1, rtol=1e-1)

    print("KERNEL_OK")
</pallas_src>

<mosaic_0001>
module attributes {stable_mosaic.version = 11 : i64} {
  func.func @_rnn_kernel(%arg0: memref<48x128xf32, #tpu.memory_space<vmem>>, %arg1: memref<8x128xf32, #tpu.memory_space<vmem>>, %arg2: memref<128x128xf32, #tpu.memory_space<vmem>>, %arg3: memref<128x128xf32, #tpu.memory_space<vmem>>, %arg4: memref<128x128xf32, #tpu.memory_space<vmem>>, %arg5: memref<1x128xf32, #tpu.memory_space<vmem>>, %arg6: memref<48x128xf32, #tpu.memory_space<vmem>>, %arg7: memref<8x128xf32, #tpu.memory_space<vmem>>, %arg8: memref<48x128xf32, #tpu.memory_space<vmem>>) attributes {dimension_semantics = [], scalar_prefetch = 0 : i64, scratch_operands = 1 : i64, tpu.core_type = #tpu.core_type<tc>} {
    %c0 = arith.constant 0 : index
    %c0_0 = arith.constant 0 : index
    %0 = vector.load %arg3[%c0, %c0_0] : memref<128x128xf32, #tpu.memory_space<vmem>>, vector<128x128xf32>
    %c0_1 = arith.constant 0 : index
    %c0_2 = arith.constant 0 : index
    %1 = vector.load %arg4[%c0_1, %c0_2] : memref<128x128xf32, #tpu.memory_space<vmem>>, vector<128x128xf32>
    %c0_3 = arith.constant 0 : index
    %c0_4 = arith.constant 0 : index
    %2 = vector.load %arg5[%c0_3, %c0_4] : memref<1x128xf32, #tpu.memory_space<vmem>>, vector<1x128xf32>
    %c0_5 = arith.constant 0 : index
    %c0_6 = arith.constant 0 : index
    %3 = vector.load %arg0[%c0_5, %c0_6] : memref<48x128xf32, #tpu.memory_space<vmem>>, vector<48x128xf32>
    %c0_7 = arith.constant 0 : index
    %c0_8 = arith.constant 0 : index
    %4 = vector.load %arg2[%c0_7, %c0_8] : memref<128x128xf32, #tpu.memory_space<vmem>>, vector<128x128xf32>
    %cst = arith.constant dense<0.000000e+00> : vector<48x128xf32>
    %5 = tpu.matmul %3, %4, %cst {dimension_numbers = #tpu.dot_dimension_numbers<[1], [0], [0], [1], [0, 0, 1, 1], [], []>} : vector<48x128xf32>, vector<128x128xf32>, vector<48x128xf32> -> vector<48x128xf32>
    %c0_9 = arith.constant 0 : index
    %c0_10 = arith.constant 0 : index
    %6 = vector.load %arg8[%c0_9, %c0_10] : memref<48x128xf32, #tpu.memory_space<vmem>>, vector<48x128xf32>
    tpu.vector_store %arg8[%c0_9, %c0_10], %5 {strides = array<i32>} : memref<48x128xf32, #tpu.memory_space<vmem>>, vector<48x128xf32>,
    %c0_11 = arith.constant 0 : index
    %c0_12 = arith.constant 0 : index
    %7 = vector.load %arg1[%c0_11, %c0_12] : memref<8x128xf32, #tpu.memory_space<vmem>>, vector<8x128xf32>
    %c0_13 = arith.constant 0 : index
    %c0_14 = arith.constant 0 : index
    %8 = vector.load %arg8[%c0_13, %c0_14] : memref<48x128xf32, #tpu.memory_space<vmem>>, vector<8x128xf32>
    %cst_15 = arith.constant dense<0.000000e+00> : vector<8x128xf32>
    %9 = tpu.matmul %7, %0, %cst_15 {dimension_numbers = #tpu.dot_dimension_numbers<[1], [0], [0], [1], [0, 0, 1, 1], [], []>} : vector<8x128xf32>, vector<128x128xf32>, vector<8x128xf32> -> vector<8x128xf32>
    %10 = arith.addf %8, %9 : vector<8x128xf32>
    %11 = math.tanh %10 : vector<8x128xf32>
    %c0_16 = arith.constant 0 : index
    %c0_17 = arith.constant 0 : index
    %12 = vector.load %arg8[%c0_16, %c0_17] : memref<48x128xf32, #tpu.memory_space<vmem>>, vector<8x128xf32>
    tpu.vector_store %arg8[%c0_16, %c0_17], %11 {strides = array<i32>} : memref<48x128xf32, #tpu.memory_space<vmem>>, vector<8x128xf32>,
    %c8 = arith.constant 8 : index
    %c0_18 = arith.constant 0 : index
    %13 = vector.load %arg8[%c8, %c0_18] : memref<48x128xf32, #tpu.memory_space<vmem>>, vector<8x128xf32>
    %cst_19 = arith.constant dense<0.000000e+00> : vector<8x128xf32>
    %14 = tpu.matmul %11, %0, %cst_19 {dimension_numbers = #tpu.dot_dimension_numbers<[1], [0], [0], [1], [0, 0, 1, 1], [], []>} : vector<8x128xf32>, vector<128x128xf32>, vector<8x128xf32> -> vector<8x128xf32>
    %15 = arith.addf %13, %14 : vector<8x128xf32>
    %16 = math.tanh %15 : vector<8x128xf32>
    %c8_20 = arith.constant 8 : index
    %c0_21 = arith.constant 0 : index
    %17 = vector.load %arg8[%c8_20, %c0_21] : memref<48x128xf32, #tpu.memory_space<vmem>>, vector<8x128xf32>
    tpu.vector_store %arg8[%c8_20, %c0_21], %16 {strides = array<i32>} : memref<48x128xf32, #tpu.memory_space<vmem>>, vector<8x128xf32>,
    %c16 = arith.constant 16 : index
    %c0_22 = arith.constant 0 : index
    %18 = vector.load %arg8[%c16, %c0_22] : memref<48x128xf32, #tpu.memory_space<vmem>>, vector<8x128xf32>
    %cst_23 = arith.constant dense<0.000000e+00> : vector<8x128xf32>
    %19 = tpu.matmul %16, %0, %cst_23 {dimension_numbers = #tpu.dot_dimension_numbers<[1], [0], [0], [1], [0, 0, 1, 1], [], []>} : vector<8x128xf32>, vector<128x128xf32>, vector<8x128xf32> -> vector<8x128xf32>
    %20 = arith.addf %18, %19 : vector<8x128xf32>
    %21 = math.tanh %20 : vector<8x128xf32>
    %c16_24 = arith.constant 16 : index
    %c0_25 = arith.constant 0 : index
    %22 = vector.load %arg8[%c16_24, %c0_25] : memref<48x128xf32, #tpu.memory_space<vmem>>, vector<8x128xf32>
    tpu.vector_store %arg8[%c16_24, %c0_25], %21 {strides = array<i32>} : memref<48x128xf32, #tpu.memory_space<vmem>>, vector<8x128xf32>,
    %c24 = arith.constant 24 : index
    %c0_26 = arith.constant 0 : index
    %23 = vector.load %arg8[%c24, %c0_26] : memref<48x128xf32, #tpu.memory_space<vmem>>, vector<8x128xf32>
    %cst_27 = arith.constant dense<0.000000e+00> : vector<8x128xf32>
    %24 = tpu.matmul %21, %0, %cst_27 {dimension_numbers = #tpu.dot_dimension_numbers<[1], [0], [0], [1], [0, 0, 1, 1], [], []>} : vector<8x128xf32>, vector<128x128xf32>, vector<8x128xf32> -> vector<8x128xf32>
    %25 = arith.addf %23, %24 : vector<8x128xf32>
    %26 = math.tanh %25 : vector<8x128xf32>
    %c24_28 = arith.constant 24 : index
    %c0_29 = arith.constant 0 : index
    %27 = vector.load %arg8[%c24_28, %c0_29] : memref<48x128xf32, #tpu.memory_space<vmem>>, vector<8x128xf32>
    tpu.vector_store %arg8[%c24_28, %c0_29], %26 {strides = array<i32>} : memref<48x128xf32, #tpu.memory_space<vmem>>, vector<8x128xf32>,
    %c32 = arith.constant 32 : index
    %c0_30 = arith.constant 0 : index
    %28 = vector.load %arg8[%c32, %c0_30] : memref<48x128xf32, #tpu.memory_space<vmem>>, vector<8x128xf32>
    %cst_31 = arith.constant dense<0.000000e+00> : vector<8x128xf32>
    %29 = tpu.matmul %26, %0, %cst_31 {dimension_numbers = #tpu.dot_dimension_numbers<[1], [0], [0], [1], [0, 0, 1, 1], [], []>} : vector<8x128xf32>, vector<128x128xf32>, vector<8x128xf32> -> vector<8x128xf32>
    %30 = arith.addf %28, %29 : vector<8x128xf32>
    %31 = math.tanh %30 : vector<8x128xf32>
    %c32_32 = arith.constant 32 : index
    %c0_33 = arith.constant 0 : index
    %32 = vector.load %arg8[%c32_32, %c0_33] : memref<48x128xf32, #tpu.memory_space<vmem>>, vector<8x128xf32>
    tpu.vector_store %arg8[%c32_32, %c0_33], %31 {strides = array<i32>} : memref<48x128xf32, #tpu.memory_space<vmem>>, vector<8x128xf32>,
    %c40 = arith.constant 40 : index
    %c0_34 = arith.constant 0 : index
    %33 = vector.load %arg8[%c40, %c0_34] : memref<48x128xf32, #tpu.memory_space<vmem>>, vector<8x128xf32>
    %cst_35 = arith.constant dense<0.000000e+00> : vector<8x128xf32>
    %34 = tpu.matmul %31, %0, %cst_35 {dimension_numbers = #tpu.dot_dimension_numbers<[1], [0], [0], [1], [0, 0, 1, 1], [], []>} : vector<8x128xf32>, vector<128x128xf32>, vector<8x128xf32> -> vector<8x128xf32>
    %35 = arith.addf %33, %34 : vector<8x128xf32>
    %36 = math.tanh %35 : vector<8x128xf32>
    %c40_36 = arith.constant 40 : index
    %c0_37 = arith.constant 0 : index
    %37 = vector.load %arg8[%c40_36, %c0_37] : memref<48x128xf32, #tpu.memory_space<vmem>>, vector<8x128xf32>
    tpu.vector_store %arg8[%c40_36, %c0_37], %36 {strides = array<i32>} : memref<48x128xf32, #tpu.memory_space<vmem>>, vector<8x128xf32>,
    %c0_38 = arith.constant 0 : index
    %c0_39 = arith.constant 0 : index
    %38 = vector.load %arg7[%c0_38, %c0_39] : memref<8x128xf32, #tpu.memory_space<vmem>>, vector<8x128xf32>
    tpu.vector_store %arg7[%c0_38, %c0_39], %36 {strides = array<i32>} : memref<8x128xf32, #tpu.memory_space<vmem>>, vector<8x128xf32>,
    %c0_40 = arith.constant 0 : index
    %c0_41 = arith.constant 0 : index
    %39 = vector.load %arg8[%c0_40, %c0_41] : memref<48x128xf32, #tpu.memory_space<vmem>>, vector<48x128xf32>
    %cst_42 = arith.constant dense<0.000000e+00> : vector<48x128xf32>
    %40 = tpu.matmul %39, %1, %cst_42 {dimension_numbers = #tpu.dot_dimension_numbers<[1], [0], [0], [1], [0, 0, 1, 1], [], []>} : vector<48x128xf32>, vector<128x128xf32>, vector<48x128xf32> -> vector<48x128xf32>
    %41 = vector.broadcast %2 : vector<1x128xf32> to vector<48x128xf32>
    %42 = arith.addf %40, %41 : vector<48x128xf32>
    %c0_43 = arith.constant 0 : index
    %c0_44 = arith.constant 0 : index
    %43 = vector.load %arg6[%c0_43, %c0_44] : memref<48x128xf32, #tpu.memory_space<vmem>>, vector<48x128xf32>
    tpu.vector_store %arg6[%c0_43, %c0_44], %42 {strides = array<i32>} : memref<48x128xf32, #tpu.memory_space<vmem>>, vector<48x128xf32>,
    return
  }
}

</mosaic_0001>

<llo_original>
// kernel: rnn_model_forward.1
$region0: #{rnn_model_forward.1}
  #allocation0 [shape = 'u32[]', space=smem, size = 0x4, offset = 0x4, fixed_abs, tag = 'smem constant byte address 0x4 - core index']
  #allocation1 [shape = 'u32[72,128]{1,0:T(1,128)}', space=vmem, size = 0x9000, scoped, tag = 'internal scratch']
  #allocation2 [shape = 'f32[48,128]{1,0:T(8,128)}', space=vmem, size = 0x6000, scoped, tag = 'scratch operand']
  %s0 = inlined_call_operand.vmem [shape: f32[48,128], index: 0, kind: input, shape index: {}]
  %s1 = inlined_call_operand.vmem [shape: f32[8,128], index: 1, kind: input, shape index: {}]
  %s2 = inlined_call_operand.vmem [shape: f32[128,128], index: 2, kind: input, shape index: {}]
  %s3 = inlined_call_operand.vmem [shape: f32[128,128], index: 3, kind: input, shape index: {}]
  %s4 = inlined_call_operand.vmem [shape: f32[128,128], index: 4, kind: input, shape index: {}]
  %s5 = inlined_call_operand.vmem [shape: f32[1,128], index: 5, kind: input, shape index: {}]
  %s6 = inlined_call_operand.vmem [shape: f32[48,128], index: 6, kind: output, shape index: {0}]
  %s7 = inlined_call_operand.vmem [shape: f32[8,128], index: 7, kind: output, shape index: {1}]
  %8 = xla_tuple %s6, %s7
  %s9 = sld [smem:[#allocation0]]
  $region42: #{rnn_model_forward.1} parent=0
    _
  %s11 = ssub.s32 1, %s9
  %s12 = scalar_select 0, %s11, %s9
  // Predicated region
  $region2: #{rnn_model_forward.1} parent=0 // pred_check
    _
  $region3: #{rnn_model_forward.1} parent=0 // pred_check_branch
    %14 = sbr.rel (0) target = $region5
  $region4: #{rnn_model_forward.1} parent=0 // pred_region
    _
  $region5: #{rnn_model_forward.1} parent=0 // pred_fallthru
    _
  // Predicated region
  $region6: #{rnn_model_forward.1} parent=0 // pred_check
    _
  $region7: #{rnn_model_forward.1} parent=0 // pred_check_branch
    %16 = sbr.rel (0) target = $region9
  $region8: #{rnn_model_forward.1} parent=0 // pred_region
    _
  $region9: #{rnn_model_forward.1} parent=0 // pred_fallthru
    _
  // Predicated region
  $region10: #{rnn_model_forward.1} parent=0 // pred_check
    _
  $region11: #{rnn_model_forward.1} parent=0 // pred_check_branch
    %18 = sbr.rel (0) target = $region13
  $region12: #{rnn_model_forward.1} parent=0 // pred_region
    _
  $region13: #{rnn_model_forward.1} parent=0 // pred_fallthru
    _
  // Predicated region
  $region14: #{rnn_model_forward.1} parent=0 // pred_check
    _
  $region15: #{rnn_model_forward.1} parent=0 // pred_check_branch
    %20 = sbr.rel (0) target = $region17
  $region16: #{rnn_model_forward.1} parent=0 // pred_region
    _
  $region17: #{rnn_model_forward.1} parent=0 // pred_fallthru
    _
  // Predicated region
  $region18: #{rnn_model_forward.1} parent=0 // pred_check
    _
  $region19: #{rnn_model_forward.1} parent=0 // pred_check_branch
    %22 = sbr.rel (0) target = $region21
  $region20: #{rnn_model_forward.1} parent=0 // pred_region
    _
  $region21: #{rnn_model_forward.1} parent=0 // pred_fallthru
    _
  // Predicated region
  $region22: #{rnn_model_forward.1} parent=0 // pred_check
    _
  $region23: #{rnn_model_forward.1} parent=0 // pred_check_branch
    %24 = sbr.rel (0) target = $region25
  $region24: #{rnn_model_forward.1} parent=0 // pred_region
    _
  $region25: #{rnn_model_forward.1} parent=0 // pred_fallthru
    _
  %v25 = vld [vmem:[%s3] sm:$0xff]
  %v26 = vld [vmem:[%s3 + $0x8] sm:$0xff]
  %v27 = vld [vmem:[%s3 + $0x10] sm:$0xff]
  %v28 = vld [vmem:[%s3 + $0x18] sm:$0xff]
  %v29 = vld [vmem:[%s3 + $0x20] sm:$0xff]
  %v30 = vld [vmem:[%s3 + $0x28] sm:$0xff]
  %v31 = vld [vmem:[%s3 + $0x30] sm:$0xff]
  %v32 = vld [vmem:[%s3 + $0x38] sm:$0xff]
  %v33 = vld [vmem:[%s3 + $0x40] sm:$0xff]
  %v34 = vld [vmem:[%s3 + $0x48] sm:$0xff]
  %v35 = vld [vmem:[%s3 + $0x50] sm:$0xff]
  %v36 = vld [vmem:[%s3 + $0x58] sm:$0xff]
  %v37 = vld [vmem:[%s3 + $0x60] sm:$0xff]
  %v38 = vld [vmem:[%s3 + $0x68] sm:$0xff]
  %v39 = vld [vmem:[%s3 + $0x70] sm:$0xff]
  %v40 = vld [vmem:[%s3 + $0x78] sm:$0xff]
  %v41 = vld [vmem:[%s4] sm:$0xff]
  %v42 = vld [vmem:[%s4 + $0x8] sm:$0xff]
  %v43 = vld [vmem:[%s4 + $0x10] sm:$0xff]
  %v44 = vld [vmem:[%s4 + $0x18] sm:$0xff]
  %v45 = vld [vmem:[%s4 + $0x20] sm:$0xff]
  %v46 = vld [vmem:[%s4 + $0x28] sm:$0xff]
  %v47 = vld [vmem:[%s4 + $0x30] sm:$0xff]
  %v48 = vld [vmem:[%s4 + $0x38] sm:$0xff]
  %v49 = vld [vmem:[%s4 + $0x40] sm:$0xff]
  %v50 = vld [vmem:[%s4 + $0x48] sm:$0xff]
  %v51 = vld [vmem:[%s4 + $0x50] sm:$0xff]
  %v52 = vld [vmem:[%s4 + $0x58] sm:$0xff]
  %v53 = vld [vmem:[%s4 + $0x60] sm:$0xff]
  %v54 = vld [vmem:[%s4 + $0x68] sm:$0xff]
  %v55 = vld [vmem:[%s4 + $0x70] sm:$0xff]
  %v56 = vld [vmem:[%s4 + $0x78] sm:$0xff]
  %v57 = vld [vmem:[%s5] sm:$0x1]
  %v58 = vld [vmem:[%s0] sm:$0xff]
  %v59 = vld [vmem:[%s0 + $0x8] sm:$0xff]
  %v60 = vld [vmem:[%s0 + $0x10] sm:$0xff]
  %v61 = vld [vmem:[%s0 + $0x18] sm:$0xff]
  %v62 = vld [vmem:[%s0 + $0x20] sm:$0xff]
  %v63 = vld [vmem:[%s0 + $0x28] sm:$0xff]
  %v64 = vld [vmem:[%s2] sm:$0xff]
  %v65 = vld [vmem:[%s2 + $0x8] sm:$0xff]
  %v66 = vld [vmem:[%s2 + $0x10] sm:$0xff]
  %v67 = vld [vmem:[%s2 + $0x18] sm:$0xff]
  %v68 = vld [vmem:[%s2 + $0x20] sm:$0xff]
  %v69 = vld [vmem:[%s2 + $0x28] sm:$0xff]
  %v70 = vld [vmem:[%s2 + $0x30] sm:$0xff]
  %v71 = vld [vmem:[%s2 + $0x38] sm:$0xff]
  %v72 = vld [vmem:[%s2 + $0x40] sm:$0xff]
  %v73 = vld [vmem:[%s2 + $0x48] sm:$0xff]
  %v74 = vld [vmem:[%s2 + $0x50] sm:$0xff]
  %v75 = vld [vmem:[%s2 + $0x58] sm:$0xff]
  %v76 = vld [vmem:[%s2 + $0x60] sm:$0xff]
  %v77 = vld [vmem:[%s2 + $0x68] sm:$0xff]
  %v78 = vld [vmem:[%s2 + $0x70] sm:$0xff]
  %v79 = vld [vmem:[%s2 + $0x78] sm:$0xff]
  %80 = vmatpush.msra.mxu0 %v79
  %81 = vmatpush.msra.mxu0 %v78
  %82 = vmatpush.msra.mxu0 %v77
  %83 = vmatpush.msra.mxu0 %v76
  %84 = vmatpush.msra.mxu0 %v75
  %85 = vmatpush.msra.mxu0 %v74
  %86 = vmatpush.msra.mxu0 %v73
  %87 = vmatpush.msra.mxu0 %v72
  %88 = vmatpush.msra.mxu0 %v71
  %89 = vmatpush.msra.mxu0 %v70
  %90 = vmatpush.msra.mxu0 %v69
  %91 = vmatpush.msra.mxu0 %v68
  %92 = vmatpush.msra.mxu0 %v67
  %93 = vmatpush.msra.mxu0 %v66
  %94 = vmatpush.msra.mxu0 %v65
  %95 = vmatpush.msra.mxu0 %v64
  %96 = vmatmul.f32.gmra.mxu0 %v58
  %v97 = vpop.f32.mrf.mxu0
  %v98 = vadd.f32 0.0, %v97
  %99 = vmatmul.f32.gmra.mxu0 %v59
  %v100 = vpop.f32.mrf.mxu0
  %v101 = vadd.f32 0.0, %v100
  %102 = vmatmul.f32.gmra.mxu0 %v60
  %v103 = vpop.f32.mrf.mxu0
  %v104 = vadd.f32 0.0, %v103
  %105 = vmatmul.f32.gmra.mxu0 %v61
  %v106 = vpop.f32.mrf.mxu0
  %v107 = vadd.f32 0.0, %v106
  %108 = vmatmul.f32.gmra.mxu0 %v62
  %v109 = vpop.f32.mrf.mxu0
  %v110 = vadd.f32 0.0, %v109
  %111 = vmatmul.f32.gmra.mxu0 %v63
  %v112 = vpop.f32.mrf.mxu0
  %v113 = vadd.f32 0.0, %v112
  %114 = vdwg.mxu0
  %115 = vst [vmem:[#allocation2] sm:$0xff] %v98
  %116 = vst [vmem:[#allocation2 + $0x8] sm:$0xff] %v101
  %117 = vst [vmem:[#allocation2 + $0x10] sm:$0xff] %v104
  %118 = vst [vmem:[#allocation2 + $0x18] sm:$0xff] %v107
  %119 = vst [vmem:[#allocation2 + $0x20] sm:$0xff] %v110
  %120 = vst [vmem:[#allocation2 + $0x28] sm:$0xff] %v113
  %v121 = vld [vmem:[%s1] sm:$0xff]
  %v122 = vld [vmem:[#allocation2] sm:$0xff]
  %123 = vmatpush.msra.mxu0 %v40
  %124 = vmatpush.msra.mxu0 %v39
  %125 = vmatpush.msra.mxu0 %v38
  %126 = vmatpush.msra.mxu0 %v37
  %127 = vmatpush.msra.mxu0 %v36
  %128 = vmatpush.msra.mxu0 %v35
  %129 = vmatpush.msra.mxu0 %v34
  %130 = vmatpush.msra.mxu0 %v33
  %131 = vmatpush.msra.mxu0 %v32
  %132 = vmatpush.msra.mxu0 %v31
  %133 = vmatpush.msra.mxu0 %v30
  %134 = vmatpush.msra.mxu0 %v29
  %135 = vmatpush.msra.mxu0 %v28
  %136 = vmatpush.msra.mxu0 %v27
  %137 = vmatpush.msra.mxu0 %v26
  %138 = vmatpush.msra.mxu0 %v25
  %139 = vmatmul.f32.gmra.mxu0 %v121
  %v140 = vpop.f32.mrf.mxu0
  %v141 = vadd.f32 0.0, %v140
  %142 = vdwg.mxu0
  %v143 = vadd.f32 %v122, %v141
  %v144 = vtanh.pop %v143
  %145 = vst [vmem:[#allocation2] sm:$0xff] %v144
  %v146 = vld [vmem:[#allocation2 + $0x8] sm:$0xff]
  %147 = vmatpush.msra.mxu0 %v40
  %148 = vmatpush.msra.mxu0 %v39
  %149 = vmatpush.msra.mxu0 %v38
  %150 = vmatpush.msra.mxu0 %v37
  %151 = vmatpush.msra.mxu0 %v36
  %152 = vmatpush.msra.mxu0 %v35
  %153 = vmatpush.msra.mxu0 %v34
  %154 = vmatpush.msra.mxu0 %v33
  %155 = vmatpush.msra.mxu0 %v32
  %156 = vmatpush.msra.mxu0 %v31
  %157 = vmatpush.msra.mxu0 %v30
  %158 = vmatpush.msra.mxu0 %v29
  %159 = vmatpush.msra.mxu0 %v28
  %160 = vmatpush.msra.mxu0 %v27
  %161 = vmatpush.msra.mxu0 %v26
  %162 = vmatpush.msra.mxu0 %v25
  %163 = vmatmul.f32.gmra.mxu0 %v144
  %v164 = vpop.f32.mrf.mxu0
  %v165 = vadd.f32 0.0, %v164
  %166 = vdwg.mxu0
  %v167 = vadd.f32 %v146, %v165
  %v168 = vtanh.pop %v167
  %169 = vst [vmem:[#allocation2 + $0x8] sm:$0xff] %v168
  %v170 = vld [vmem:[#allocation2 + $0x10] sm:$0xff]
  %171 = vmatpush.msra.mxu0 %v40
  %172 = vmatpush.msra.mxu0 %v39
  %173 = vmatpush.msra.mxu0 %v38
  %174 = vmatpush.msra.mxu0 %v37
  %175 = vmatpush.msra.mxu0 %v36
  %176 = vmatpush.msra.mxu0 %v35
  %177 = vmatpush.msra.mxu0 %v34
  %178 = vmatpush.msra.mxu0 %v33
  %179 = vmatpush.msra.mxu0 %v32
  %180 = vmatpush.msra.mxu0 %v31
  %181 = vmatpush.msra.mxu0 %v30
  %182 = vmatpush.msra.mxu0 %v29
  %183 = vmatpush.msra.mxu0 %v28
  %184 = vmatpush.msra.mxu0 %v27
  %185 = vmatpush.msra.mxu0 %v26
  %186 = vmatpush.msra.mxu0 %v25
  %187 = vmatmul.f32.gmra.mxu0 %v168
  %v188 = vpop.f32.mrf.mxu0
  %v189 = vadd.f32 0.0, %v188
  %190 = vdwg.mxu0
  %v191 = vadd.f32 %v170, %v189
  %v192 = vtanh.pop %v191
  %193 = vst [vmem:[#allocation2 + $0x10] sm:$0xff] %v192
  %v194 = vld [vmem:[#allocation2 + $0x18] sm:$0xff]
  %195 = vmatpush.msra.mxu0 %v40
  %196 = vmatpush.msra.mxu0 %v39
  %197 = vmatpush.msra.mxu0 %v38
  %198 = vmatpush.msra.mxu0 %v37
  %199 = vmatpush.msra.mxu0 %v36
  %200 = vmatpush.msra.mxu0 %v35
  %201 = vmatpush.msra.mxu0 %v34
  %202 = vmatpush.msra.mxu0 %v33
  %203 = vmatpush.msra.mxu0 %v32
  %204 = vmatpush.msra.mxu0 %v31
  %205 = vmatpush.msra.mxu0 %v30
  %206 = vmatpush.msra.mxu0 %v29
  %207 = vmatpush.msra.mxu0 %v28
  %208 = vmatpush.msra.mxu0 %v27
  %209 = vmatpush.msra.mxu0 %v26
  %210 = vmatpush.msra.mxu0 %v25
  %211 = vmatmul.f32.gmra.mxu0 %v192
  %v212 = vpop.f32.mrf.mxu0
  %v213 = vadd.f32 0.0, %v212
  %214 = vdwg.mxu0
  %v215 = vadd.f32 %v194, %v213
  %v216 = vtanh.pop %v215
  %217 = vst [vmem:[#allocation2 + $0x18] sm:$0xff] %v216
  %v218 = vld [vmem:[#allocation2 + $0x20] sm:$0xff]
  %219 = vmatpush.msra.mxu0 %v40
  %220 = vmatpush.msra.mxu0 %v39
  %221 = vmatpush.msra.mxu0 %v38
  %222 = vmatpush.msra.mxu0 %v37
  %223 = vmatpush.msra.mxu0 %v36
  %224 = vmatpush.msra.mxu0 %v35
  %225 = vmatpush.msra.mxu0 %v34
  %226 = vmatpush.msra.mxu0 %v33
  %227 = vmatpush.msra.mxu0 %v32
  %228 = vmatpush.msra.mxu0 %v31
  %229 = vmatpush.msra.mxu0 %v30
  %230 = vmatpush.msra.mxu0 %v29
  %231 = vmatpush.msra.mxu0 %v28
  %232 = vmatpush.msra.mxu0 %v27
  %233 = vmatpush.msra.mxu0 %v26
  %234 = vmatpush.msra.mxu0 %v25
  %235 = vmatmul.f32.gmra.mxu0 %v216
  %v236 = vpop.f32.mrf.mxu0
  %v237 = vadd.f32 0.0, %v236
  %238 = vdwg.mxu0
  %v239 = vadd.f32 %v218, %v237
  %v240 = vtanh.pop %v239
  %241 = vst [vmem:[#allocation2 + $0x20] sm:$0xff] %v240
  %v242 = vld [vmem:[#allocation2 + $0x28] sm:$0xff]
  %243 = vmatpush.msra.mxu0 %v40
  %244 = vmatpush.msra.mxu0 %v39
  %245 = vmatpush.msra.mxu0 %v38
  %246 = vmatpush.msra.mxu0 %v37
  %247 = vmatpush.msra.mxu0 %v36
  %248 = vmatpush.msra.mxu0 %v35
  %249 = vmatpush.msra.mxu0 %v34
  %250 = vmatpush.msra.mxu0 %v33
  %251 = vmatpush.msra.mxu0 %v32
  %252 = vmatpush.msra.mxu0 %v31
  %253 = vmatpush.msra.mxu0 %v30
  %254 = vmatpush.msra.mxu0 %v29
  %255 = vmatpush.msra.mxu0 %v28
  %256 = vmatpush.msra.mxu0 %v27
  %257 = vmatpush.msra.mxu0 %v26
  %258 = vmatpush.msra.mxu0 %v25
  %259 = vmatmul.f32.gmra.mxu0 %v240
  %v260 = vpop.f32.mrf.mxu0
  %v261 = vadd.f32 0.0, %v260
  %262 = vdwg.mxu0
  %v263 = vadd.f32 %v242, %v261
  %v264 = vtanh.pop %v263
  %265 = vst [vmem:[#allocation2 + $0x28] sm:$0xff] %v264
  %266 = vst [vmem:[%s7] sm:$0xff] %v264
  %v267 = vld [vmem:[#allocation2] sm:$0xff]
  %v268 = vld [vmem:[#allocation2 + $0x8] sm:$0xff]
  %v269 = vld [vmem:[#allocation2 + $0x10] sm:$0xff]
  %v270 = vld [vmem:[#allocation2 + $0x18] sm:$0xff]
  %v271 = vld [vmem:[#allocation2 + $0x20] sm:$0xff]
  %v272 = vld [vmem:[#allocation2 + $0x28] sm:$0xff]
  %v274 = vperm.slane %v57, 0
  %276 = vmatpush.msra.mxu0 %v56
  %277 = vmatpush.msra.mxu0 %v55
  %278 = vmatpush.msra.mxu0 %v54
  %279 = vmatpush.msra.mxu0 %v53
  %280 = vmatpush.msra.mxu0 %v52
  %281 = vmatpush.msra.mxu0 %v51
  %282 = vmatpush.msra.mxu0 %v50
  %283 = vmatpush.msra.mxu0 %v49
  %284 = vmatpush.msra.mxu0 %v48
  %285 = vmatpush.msra.mxu0 %v47
  %286 = vmatpush.msra.mxu0 %v46
  %287 = vmatpush.msra.mxu0 %v45
  %288 = vmatpush.msra.mxu0 %v44
  %289 = vmatpush.msra.mxu0 %v43
  %290 = vmatpush.msra.mxu0 %v42
  %291 = vmatpush.msra.mxu0 %v41
  %292 = vmatmul.f32.gmra.mxu0 %v267
  %v293 = vpop.f32.mrf.mxu0
  %v294 = vadd.f32 %v274, %v293
  %295 = vmatmul.f32.gmra.mxu0 %v268
  %v296 = vpop.f32.mrf.mxu0
  %v297 = vadd.f32 %v274, %v296
  %298 = vmatmul.f32.gmra.mxu0 %v269
  %v299 = vpop.f32.mrf.mxu0
  %v300 = vadd.f32 %v274, %v299
  %301 = vmatmul.f32.gmra.mxu0 %v270
  %v302 = vpop.f32.mrf.mxu0
  %v303 = vadd.f32 %v274, %v302
  %304 = vmatmul.f32.gmra.mxu0 %v271
  %v305 = vpop.f32.mrf.mxu0
  %v306 = vadd.f32 %v274, %v305
  %307 = vmatmul.f32.gmra.mxu0 %v272
  %v308 = vpop.f32.mrf.mxu0
  %v309 = vadd.f32 %v274, %v308
  %310 = vdwg.mxu0
  %311 = vst [vmem:[%s6] sm:$0xff] %v294
  %312 = vst [vmem:[%s6 + $0x8] sm:$0xff] %v297
  %313 = vst [vmem:[%s6 + $0x10] sm:$0xff] %v300
  %314 = vst [vmem:[%s6 + $0x18] sm:$0xff] %v303
  %315 = vst [vmem:[%s6 + $0x20] sm:$0xff] %v306
  %316 = vst [vmem:[%s6 + $0x28] sm:$0xff] %v309
  // Predicated region
  $region26: #{rnn_model_forward.1} parent=0 // pred_check
    _
  $region27: #{rnn_model_forward.1} parent=0 // pred_check_branch
    %318 = sbr.rel (0) target = $region29
  $region28: #{rnn_model_forward.1} parent=0 // pred_region
    _
  $region29: #{rnn_model_forward.1} parent=0 // pred_fallthru
    _
  // Predicated region
  $region30: #{rnn_model_forward.1} parent=0 // pred_check
    _
  $region31: #{rnn_model_forward.1} parent=0 // pred_check_branch
    %320 = sbr.rel (0) target = $region33
  $region32: #{rnn_model_forward.1} parent=0 // pred_region
    _
  $region33: #{rnn_model_forward.1} parent=0 // pred_fallthru
    _
  // Predicated region
  $region34: #{rnn_model_forward.1} parent=0 // pred_check
    _
  $region35: #{rnn_model_forward.1} parent=0 // pred_check_branch
    %322 = sbr.rel (0) target = $region37
  $region36: #{rnn_model_forward.1} parent=0 // pred_region
    _
  $region37: #{rnn_model_forward.1} parent=0 // pred_fallthru
    _
  // Predicated region
  $region38: #{rnn_model_forward.1} parent=0 // pred_check
    _
  $region39: #{rnn_model_forward.1} parent=0 // pred_check_branch
    %324 = sbr.rel (0) target = $region41
  $region40: #{rnn_model_forward.1} parent=0 // pred_region
    _
  $region41: #{rnn_model_forward.1} parent=0 // pred_fallthru
    _

</llo_original>
